<compile_context>
chip_gen: v6e
topology: v6e:2x2x1
jax: 0.10.0
libtpu: 0.0.40
codegen_flags: <defaults>
</compile_context>

<pallas_src>
import functools

import jax
import jax.numpy as jnp
from jax.experimental import pallas as pl
from jax.experimental.pallas import tpu as pltpu


def _conv_taps(w_ref, x, *, k, length):
    # w_ref: (k, C_out, C_in) resident in VMEM; x: (C_in, L + 2*pad) block.
    # Accumulate the k taps as small matmuls in f32.
    y = jnp.dot(w_ref[0], x[:, 0:length], preferred_element_type=jnp.float32)
    for t in range(1, k):
        y = y + jnp.dot(w_ref[t], x[:, t:t + length],
                        preferred_element_type=jnp.float32)
    return y  # (C_out, L), f32


def _conv_stats_kernel(w_ref, x_ref, ssum_ref, ssq_ref, *, k, length):
    # Pass 1: per-batch partial batch statistics of the conv output (f32).
    y = _conv_taps(w_ref, x_ref[...], k=k, length=length)        # (C_out, L)
    ssum_ref[...] = jnp.sum(y, axis=1, keepdims=True)            # (C_out, 1)
    ssq_ref[...] = jnp.sum(y * y, axis=1, keepdims=True)         # (C_out, 1)


def _conv_bn_lrelu_kernel(w_ref, x_ref, ssum_ref, ssq_ref, o_ref, *,
                          k, length, count, eps, negative_slope):
    # Pass 2: recompute conv, reduce stats in-kernel, fused BN + LeakyReLU.
    y = _conv_taps(w_ref, x_ref[...], k=k, length=length)        # (C_out, L) f32
    inv_count = 1.0 / count
    mean = jnp.sum(ssum_ref[...], axis=0) * inv_count            # (C_out, 1)
    ex2 = jnp.sum(ssq_ref[...], axis=0) * inv_count              # (C_out, 1)
    var = jnp.maximum(ex2 - mean * mean, 0.0)                    # biased var (BN)
    inv_std = jax.lax.rsqrt(var + eps)                           # EUP
    z = (y - mean) * inv_std                                     # all f32 math
    o_ref[...] = jnp.where(z >= 0, z, negative_slope * z).astype(o_ref.dtype)


def single_conv(x, w, *, eps=1e-5, negative_slope=0.01):
    """SingleConv forward.  x: (N, C_in, L), w: (C_out, C_in, k) -> (N, C_out, L)."""
    n, c_in, length = x.shape
    c_out, c_in_w, k = w.shape
    assert c_in_w == c_in
    pad = (k - 1) // 2
    lp = length + 2 * pad
    f32 = jnp.float32
    esz = jnp.dtype(x.dtype).itemsize

    # Wrapper-side prep: single reflect pad (per batch, so taps never cross batch
    # boundaries) and a tiny weight transpose to (k, C_out, C_in).
    x_pad = jnp.pad(x, ((0, 0), (0, 0), (pad, pad)), mode="reflect")
    w_t = jnp.transpose(w, (2, 0, 1))

    # ---- pass 1: per-batch partial (sum, sum-of-squares) of the conv output ----
    ssum, ssq = pl.pallas_call(
        functools.partial(_conv_stats_kernel, k=k, length=length),
        out_shape=(
            jax.ShapeDtypeStruct((n, c_out, 1), f32),
            jax.ShapeDtypeStruct((n, c_out, 1), f32),
        ),
        grid_spec=pltpu.PrefetchScalarGridSpec(
            num_scalar_prefetch=0,
            grid=(n,),
            in_specs=[
                pl.BlockSpec((k, c_out, c_in), lambda b: (0, 0, 0)),   # weights resident
                pl.BlockSpec((None, c_in, lp), lambda b: (b, 0, 0)),   # per-batch row
            ],
            out_specs=(
                pl.BlockSpec((None, c_out, 1), lambda b: (b, 0, 0)),
                pl.BlockSpec((None, c_out, 1), lambda b: (b, 0, 0)),
            ),
        ),
        compiler_params=pltpu.CompilerParams(dimension_semantics=("parallel",)),
        cost_estimate=pl.CostEstimate(
            flops=2 * n * c_out * k * c_in * length + 3 * n * c_out * length,
            transcendentals=0,
            bytes_accessed=esz * (n * c_in * lp + k * c_out * c_in)
            + 4 * 2 * n * c_out,
        ),
    )(w_t, x_pad)

    # ---- pass 2: conv recompute + in-kernel stats reduction + BN + LeakyReLU ----
    out = pl.pallas_call(
        functools.partial(_conv_bn_lrelu_kernel, k=k, length=length,
                          count=float(n * length), eps=float(eps),
                          negative_slope=float(negative_slope)),
        out_shape=jax.ShapeDtypeStruct((n, c_out, length), x.dtype),
        grid_spec=pltpu.PrefetchScalarGridSpec(
            num_scalar_prefetch=0,
            grid=(n,),
            in_specs=[
                pl.BlockSpec((k, c_out, c_in), lambda b: (0, 0, 0)),   # weights resident
                pl.BlockSpec((None, c_in, lp), lambda b: (b, 0, 0)),   # per-batch row
                pl.BlockSpec((n, c_out, 1), lambda b: (0, 0, 0)),      # full stats (tiny)
                pl.BlockSpec((n, c_out, 1), lambda b: (0, 0, 0)),
            ],
            out_specs=pl.BlockSpec((None, c_out, length), lambda b: (b, 0, 0)),
        ),
        compiler_params=pltpu.CompilerParams(dimension_semantics=("parallel",)),
        cost_estimate=pl.CostEstimate(
            flops=2 * n * c_out * k * c_in * length + 5 * n * c_out * length,
            transcendentals=c_out,
            bytes_accessed=esz * (n * c_in * lp + k * c_out * c_in
                                  + n * c_out * length) + 4 * 2 * n * c_out,
        ),
    )(w_t, x_pad, ssum, ssq)

    return out


if __name__ == "__main__":
    # Small shapes consistent with the module: batch=2, C_in=4, C_out=8, L=16, k=3.
    N, C_IN, C_OUT, L, K = 2, 4, 8, 16, 3

    key = jax.random.PRNGKey(0)
    kx, kw = jax.random.split(key)
    x = jax.random.normal(kx, (N, C_IN, L), dtype=jnp.float32)

    # Deterministic weight mimicking nn.Conv1d default init; shape (C_out, C_in, k).
    bound = 1.0 / jnp.sqrt(jnp.float32(C_IN * K))
    w = jax.random.uniform(kw, (C_OUT, C_IN, K), minval=-bound, maxval=bound,
                           dtype=jnp.float32)

    out = single_conv(x, w)
    out = jax.block_until_ready(out)

    # Pure-JAX reference: Conv1d(reflect pad, no bias) -> BatchNorm1d(affine=False,
    # training-mode batch stats, eps=1e-5) -> LeakyReLU(0.01).
    pad = (K - 1) // 2
    x_pad = jnp.pad(x, ((0, 0), (0, 0), (pad, pad)), mode="reflect")
    conv = sum(
        jnp.einsum("oc,ncl->nol", w[:, :, t], x_pad[:, :, t:t + L],
                   precision=jax.lax.Precision.HIGHEST)
        for t in range(K)
    )
    mean = conv.mean(axis=(0, 2), keepdims=True)
    var = conv.var(axis=(0, 2), keepdims=True)           # biased, like BN
    ref = (conv - mean) / jnp.sqrt(var + 1e-5)
    ref = jnp.where(ref >= 0, ref, 0.01 * ref)

    assert out.shape == (N, C_OUT, L)
    assert jnp.allclose(out, ref, atol=1e-4, rtol=1e-4), float(jnp.max(jnp.abs(out - ref)))

    print("KERNEL_OK")
</pallas_src>

<mosaic_0001>
module attributes {stable_mosaic.version = 11 : i64} {
  func.func @_conv_stats_kernel(%arg0: i32, %arg1: memref<3x8x4xf32, #tpu.memory_space<vmem>>, %arg2: memref<1x4x18xf32, #tpu.memory_space<vmem>>, %arg3: memref<1x8x1xf32, #tpu.memory_space<vmem>>, %arg4: memref<1x8x1xf32, #tpu.memory_space<vmem>>) attributes {dimension_semantics = [#tpu.dimension_semantics<parallel>], iteration_bounds = array<i64: 2>, scalar_prefetch = 0 : i64, scratch_operands = 0 : i64, tpu.core_type = #tpu.core_type<tc>, window_params = [{pipeline_mode = #tpu.pipeline_mode<synchronous>, transform_indices = @transform_0, window_bounds = array<i64: 3, 8, 4>}, {transform_indices = @transform_1, window_bounds = array<i64: 1, 4, 18>}, {transform_indices = @transform_2, window_bounds = array<i64: 1, 8, 1>}, {transform_indices = @transform_3, window_bounds = array<i64: 1, 8, 1>}]} {
    %c0 = arith.constant 0 : index
    %c0_0 = arith.constant 0 : index
    %c0_1 = arith.constant 0 : index
    %0 = vector.load %arg2[%c0, %c0_0, %c0_1] : memref<1x4x18xf32, #tpu.memory_space<vmem>>, vector<1x4x18xf32>
    %1 = vector.shape_cast %0 : vector<1x4x18xf32> to vector<4x18xf32>
    %c0_2 = arith.constant 0 : index
    %c0_3 = arith.constant 0 : index
    %c0_4 = arith.constant 0 : index
    %2 = vector.load %arg1[%c0_2, %c0_3, %c0_4] : memref<3x8x4xf32, #tpu.memory_space<vmem>>, vector<1x8x4xf32>
    %3 = vector.shape_cast %2 : vector<1x8x4xf32> to vector<8x4xf32>
    %4 = vector.extract_strided_slice %1 {offsets = [0, 0], sizes = [4, 16], strides = [1, 1]} : vector<4x18xf32> to vector<4x16xf32>
    %cst = arith.constant dense<0.000000e+00> : vector<8x16xf32>
    %5 = tpu.matmul %3, %4, %cst {dimension_numbers = #tpu.dot_dimension_numbers<[1], [0], [0], [1], [0, 0, 1, 1], [], []>} : vector<8x4xf32>, vector<4x16xf32>, vector<8x16xf32> -> vector<8x16xf32>
    %c1 = arith.constant 1 : index
    %c0_5 = arith.constant 0 : index
    %c0_6 = arith.constant 0 : index
    %6 = vector.load %arg1[%c1, %c0_5, %c0_6] : memref<3x8x4xf32, #tpu.memory_space<vmem>>, vector<1x8x4xf32>
    %7 = vector.shape_cast %6 : vector<1x8x4xf32> to vector<8x4xf32>
    %8 = vector.extract_strided_slice %1 {offsets = [0, 1], sizes = [4, 16], strides = [1, 1]} : vector<4x18xf32> to vector<4x16xf32>
    %cst_7 = arith.constant dense<0.000000e+00> : vector<8x16xf32>
    %9 = tpu.matmul %7, %8, %cst_7 {dimension_numbers = #tpu.dot_dimension_numbers<[1], [0], [0], [1], [0, 0, 1, 1], [], []>} : vector<8x4xf32>, vector<4x16xf32>, vector<8x16xf32> -> vector<8x16xf32>
    %10 = arith.addf %5, %9 : vector<8x16xf32>
    %c2 = arith.constant 2 : index
    %c0_8 = arith.constant 0 : index
    %c0_9 = arith.constant 0 : index
    %11 = vector.load %arg1[%c2, %c0_8, %c0_9] : memref<3x8x4xf32, #tpu.memory_space<vmem>>, vector<1x8x4xf32>
    %12 = vector.shape_cast %11 : vector<1x8x4xf32> to vector<8x4xf32>
    %13 = vector.extract_strided_slice %1 {offsets = [0, 2], sizes = [4, 16], strides = [1, 1]} : vector<4x18xf32> to vector<4x16xf32>
    %cst_10 = arith.constant dense<0.000000e+00> : vector<8x16xf32>
    %14 = tpu.matmul %12, %13, %cst_10 {dimension_numbers = #tpu.dot_dimension_numbers<[1], [0], [0], [1], [0, 0, 1, 1], [], []>} : vector<8x4xf32>, vector<4x16xf32>, vector<8x16xf32> -> vector<8x16xf32>
    %15 = arith.addf %10, %14 : vector<8x16xf32>
    %cst_11 = arith.constant dense<0.000000e+00> : vector<8xf32>
    %16 = vector.multi_reduction <add>, %15, %cst_11 [1] : vector<8x16xf32> to vector<8xf32>
    %17 = vector.shape_cast %16 : vector<8xf32> to vector<8x1xf32>
    %c0_12 = arith.constant 0 : index
    %c0_13 = arith.constant 0 : index
    %c0_14 = arith.constant 0 : index
    %18 = vector.load %arg3[%c0_12, %c0_13, %c0_14] : memref<1x8x1xf32, #tpu.memory_space<vmem>>, vector<1x8x1xf32>
    %19 = vector.shape_cast %18 : vector<1x8x1xf32> to vector<8x1xf32>
    %20 = vector.shape_cast %17 : vector<8x1xf32> to vector<1x8x1xf32>
    tpu.vector_store %arg3[%c0_12, %c0_13, %c0_14], %20 {strides = array<i32>} : memref<1x8x1xf32, #tpu.memory_space<vmem>>, vector<1x8x1xf32>,
    %21 = arith.mulf %15, %15 : vector<8x16xf32>
    %cst_15 = arith.constant dense<0.000000e+00> : vector<8xf32>
    %22 = vector.multi_reduction <add>, %21, %cst_15 [1] : vector<8x16xf32> to vector<8xf32>
    %23 = vector.shape_cast %22 : vector<8xf32> to vector<8x1xf32>
    %c0_16 = arith.constant 0 : index
    %c0_17 = arith.constant 0 : index
    %c0_18 = arith.constant 0 : index
    %24 = vector.load %arg4[%c0_16, %c0_17, %c0_18] : memref<1x8x1xf32, #tpu.memory_space<vmem>>, vector<1x8x1xf32>
    %25 = vector.shape_cast %24 : vector<1x8x1xf32> to vector<8x1xf32>
    %26 = vector.shape_cast %23 : vector<8x1xf32> to vector<1x8x1xf32>
    tpu.vector_store %arg4[%c0_16, %c0_17, %c0_18], %26 {strides = array<i32>} : memref<1x8x1xf32, #tpu.memory_space<vmem>>, vector<1x8x1xf32>,
    return
  }
  func.func @transform_0(%arg0: i32) -> (i32, i32, i32) {
    %c0_i32 = arith.constant 0 : i32
    %c0_i32_0 = arith.constant 0 : i32
    %c0_i32_1 = arith.constant 0 : i32
    %c0_i32_2 = arith.constant 0 : i32
    return %c0_i32, %c0_i32_0, %c0_i32_1 : i32, i32, i32
  }
  func.func @transform_1(%arg0: i32) -> (i32, i32, i32) {
    %c0_i32 = arith.constant 0 : i32
    %c0_i32_0 = arith.constant 0 : i32
    %c0_i32_1 = arith.constant 0 : i32
    return %arg0, %c0_i32, %c0_i32_0 : i32, i32, i32
  }
  func.func @transform_2(%arg0: i32) -> (i32, i32, i32) {
    %c0_i32 = arith.constant 0 : i32
    %c0_i32_0 = arith.constant 0 : i32
    %c0_i32_1 = arith.constant 0 : i32
    return %arg0, %c0_i32, %c0_i32_0 : i32, i32, i32
  }
  func.func @transform_3(%arg0: i32) -> (i32, i32, i32) {
    %c0_i32 = arith.constant 0 : i32
    %c0_i32_0 = arith.constant 0 : i32
    %c0_i32_1 = arith.constant 0 : i32
    return %arg0, %c0_i32, %c0_i32_0 : i32, i32, i32
  }
}

</mosaic_0001>

<llo_original>
// kernel: tpu_custom_call.1
$region0: #{tpu_custom_call.1}
  #allocation0 [shape = 'u32[]', space=smem, size = 0x4, offset = 0x4, fixed_abs, tag = 'smem constant byte address 0x4 - core index']
  #allocation1 [shape = 'u32[144,128]{1,0:T(1,128)}', space=vmem, size = 0x12000, scoped, tag = 'internal scratch']
  %s0 = inlined_call_operand.vmem [shape: f32[3,8,4], index: 0, kind: input, shape index: {}]
  %s1 = inlined_call_operand.vmem [shape: f32[2,4,18], index: 1, kind: input, shape index: {}]
  %s2 = inlined_call_operand.vmem [shape: f32[2,8,1], index: 2, kind: output, shape index: {0}]
  %s3 = inlined_call_operand.vmem [shape: f32[2,8,1], index: 3, kind: output, shape index: {1}]
  %4 = xla_tuple %s2, %s3
  %s5 = sld [smem:[#allocation0]]
  $region49: #{tpu_custom_call.1} parent=0
    _
  %s7 = ssub.s32 1, %s5
  %s8 = scalar_select 0, %s7, %s5
  loop: start=0, step=1, limit=4
  $region2: #{tpu_custom_call.1} parent=0 // loop_pre_header
    _
  $region3: #{tpu_custom_call.1} parent=0 // loop_header
    %s10 = sphi 0, %s14
    %p11 = scmp.ge.s32.totalorder %s10, 4
    %s18 = sphi 0, %s18
    %s20 = sphi 0, %s18
    %s21 = sphi 0, %s20
    %s35 = sphi 0, %s21
    %s41 = sphi 0, %s43
    %s44 = sphi 0, %s41
    %s45 = sphi 0, %s44
    %s61 = sphi 0, %s45
    %s67 = sphi 0, %s69
    %s70 = sphi 0, %s67
    %s71 = sphi 0, %s70
    %s87 = sphi 0, %s71
    %s93 = sphi 0, %s95
    %s96 = sphi 0, %s93
    %s97 = sphi 0, %s96
    %s113 = sphi 0, %s97
  $region4: #{tpu_custom_call.1} parent=0 // loop_header_branch
    %13 = sbr.rel (%p11) target = $region8
  $region5: #{tpu_custom_call.1} parent=0 // loop_body
    %s15 = ssub.s32 %s10, 1
    %s16 = ssub.s32 %s10, 2
    %s17 = sadd.s32 %s10, 1
    %s19 = sadd.s32 %s18, 1
    %p22 = scmp.eq.s32.totalorder %s10, 1
    %p23 = scmp.ne.s32.totalorder %s18, %s20
    %p24 = scmp.eq.s32.totalorder %s10, 0
    %p25 = por %p23, %p24
    %p26 = scmp.ne.s32.totalorder %s18, %s20
    %p27 = scmp.eq.s32.totalorder %s15, 1
    %p28 = por %p26, %p27
    %p29 = scmp.ne.s32.totalorder %s20, %s21
    %p30 = scmp.eq.s32.totalorder %s15, 0
    %p31 = por %p29, %p30
    %p32 = scmp.ne.s32.totalorder %s20, %s21
    %p33 = scmp.eq.s32.totalorder %s16, 1
    %p34 = por %p32, %p33
    %p36 = scmp.ne.s32.totalorder %s21, %s35
    %p37 = scmp.eq.s32.totalorder %s16, 0
    %p38 = por %p36, %p37
    %s39 = ssub.s32 %s10, %s17
    %p40 = scmp.eq.s32.totalorder %s39, 0
    %s42 = sadd.s32 %s41, 1
    %s43 = scalar_select %p40, %s41, %s42
    %p46 = pneg %p40
    %p47 = scmp.eq.s32.totalorder %s10, 1
    %p48 = por %p46, %p47
    %p49 = scmp.ne.s32.totalorder %s41, %s44
    %p50 = scmp.eq.s32.totalorder %s10, 0
    %p51 = por %p49, %p50
    %p52 = scmp.ne.s32.totalorder %s41, %s44
    %p53 = scmp.eq.s32.totalorder %s15, 1
    %p54 = por %p52, %p53
    %p55 = scmp.ne.s32.totalorder %s44, %s45
    %p56 = scmp.eq.s32.totalorder %s15, 0
    %p57 = por %p55, %p56
    %p58 = scmp.ne.s32.totalorder %s44, %s45
    %p59 = scmp.eq.s32.totalorder %s16, 1
    %p60 = por %p58, %p59
    %p62 = scmp.ne.s32.totalorder %s45, %s61
    %p63 = scmp.eq.s32.totalorder %s16, 0
    %p64 = por %p62, %p63
    %s65 = ssub.s32 %s10, %s17
    %p66 = scmp.eq.s32.totalorder %s65, 0
    %s68 = sadd.s32 %s67, 1
    %s69 = scalar_select %p66, %s67, %s68
    %p72 = pneg %p66
    %p73 = scmp.eq.s32.totalorder %s10, 1
    %p74 = por %p72, %p73
    %p75 = scmp.ne.s32.totalorder %s67, %s70
    %p76 = scmp.eq.s32.totalorder %s10, 0
    %p77 = por %p75, %p76
    %p78 = scmp.ne.s32.totalorder %s67, %s70
    %p79 = scmp.eq.s32.totalorder %s15, 1
    %p80 = por %p78, %p79
    %p81 = scmp.ne.s32.totalorder %s70, %s71
    %p82 = scmp.eq.s32.totalorder %s15, 0
    %p83 = por %p81, %p82
    %p84 = scmp.ne.s32.totalorder %s70, %s71
    %p85 = scmp.eq.s32.totalorder %s16, 1
    %p86 = por %p84, %p85
    %p88 = scmp.ne.s32.totalorder %s71, %s87
    %p89 = scmp.eq.s32.totalorder %s16, 0
    %p90 = por %p88, %p89
    %s91 = ssub.s32 %s10, %s17
    %p92 = scmp.eq.s32.totalorder %s91, 0
    %s94 = sadd.s32 %s93, 1
    %s95 = scalar_select %p92, %s93, %s94
    %p98 = pneg %p92
    %p99 = scmp.eq.s32.totalorder %s10, 1
    %p100 = por %p98, %p99
    %p101 = scmp.ne.s32.totalorder %s93, %s96
    %p102 = scmp.eq.s32.totalorder %s10, 0
    %p103 = por %p101, %p102
    %p104 = scmp.ne.s32.totalorder %s93, %s96
    %p105 = scmp.eq.s32.totalorder %s15, 1
    %p106 = por %p104, %p105
    %p107 = scmp.ne.s32.totalorder %s96, %s97
    %p108 = scmp.eq.s32.totalorder %s15, 0
    %p109 = por %p107, %p108
    %p110 = scmp.ne.s32.totalorder %s96, %s97
    %p111 = scmp.eq.s32.totalorder %s16, 1
    %p112 = por %p110, %p111
    %p114 = scmp.ne.s32.totalorder %s97, %s113
    %p115 = scmp.eq.s32.totalorder %s16, 0
    %p116 = por %p114, %p115
    %p117 = scmp.le.s32.totalorder 1, %s10
    %p118 = scmp.lt.s32.totalorder %s10, 3
    %p119 = pnand %p117, %p118
    %p120 = pneg %p119
    // Predicated region
    $region9: #{tpu_custom_call.1} parent=5 // pred_check
      _
    $region10: #{tpu_custom_call.1} parent=5 // pred_check_branch
      %122 = sbr.rel (%p119) target = $region12
    $region11: #{tpu_custom_call.1} parent=5 // pred_region
      %s123 = ssub.s32 %s10, 1
      // Predicated region
      $region13: #{tpu_custom_call.1} parent=11 // pred_check
        %p124 = pneg %p31
      $region14: #{tpu_custom_call.1} parent=11 // pred_check_branch
        %126 = sbr.rel (%p124) target = $region16
      $region15: #{tpu_custom_call.1} parent=11 // pred_region
        _
      $region16: #{tpu_custom_call.1} parent=11 // pred_fallthru
        _
    $region12: #{tpu_custom_call.1} parent=5 // pred_fallthru
      _
    %p127 = scmp.lt.s32.totalorder %s10, 2
    // Predicated region
    $region17: #{tpu_custom_call.1} parent=5 // pred_check
      %p128 = pneg %p127
    $region18: #{tpu_custom_call.1} parent=5 // pred_check_branch
      %130 = sbr.rel (%p128) target = $region20
    $region19: #{tpu_custom_call.1} parent=5 // pred_region
      // Predicated region
      $region21: #{tpu_custom_call.1} parent=19 // pred_check
        %p131 = pneg %p51
      $region22: #{tpu_custom_call.1} parent=19 // pred_check_branch
        %133 = sbr.rel (%p131) target = $region24
      $region23: #{tpu_custom_call.1} parent=19 // pred_region
        %p134 = scmp.lt.s32.totalorder %s10, 1
        %s135 = scalar_select %p134, %s10, 1
        %s136 = smul.addr %s135, 4
        %s137 = scalar_lea.vmem %s1, %s136
      $region24: #{tpu_custom_call.1} parent=19 // pred_fallthru
        _
    $region20: #{tpu_custom_call.1} parent=5 // pred_fallthru
      _
    %p138 = scmp.le.s32.totalorder 1, %s10
    %p139 = scmp.lt.s32.totalorder %s10, 3
    %p140 = pnand %p138, %p139
    %p141 = pneg %p140
    // Predicated region
    $region25: #{tpu_custom_call.1} parent=5 // pred_check
      _
    $region26: #{tpu_custom_call.1} parent=5 // pred_check_branch
      %143 = sbr.rel (%p140) target = $region28
    $region27: #{tpu_custom_call.1} parent=5 // pred_region
      %s144 = ssub.s32 %s10, 1
      %p145 = pneg %p31
      %p146 = pneg %p28
      %p147 = scmp.lt.s32.totalorder %s15, 1
      %s148 = scalar_select %p147, %s15, 1
      %s149 = smul.addr %s148, 4
      %s150 = scalar_lea.vmem %s1, %s149
      %p151 = pneg %p57
      %p152 = pneg %p54
      %p153 = pneg %p83
      %p154 = pneg %p80
      %p155 = scmp.lt.s32.totalorder %s15, 1
      %s156 = scalar_select %p155, %s15, 1
      %s157 = smul.addr %s156, 8
      %s158 = scalar_lea.vmem %s2, %s157
      %p159 = pneg %p109
      %p160 = pneg %p106
      %p161 = scmp.lt.s32.totalorder %s15, 1
      %s162 = scalar_select %p161, %s15, 1
      %s163 = smul.addr %s162, 8
      %s164 = scalar_lea.vmem %s3, %s163
      %p165 = scmp.lt.s32.totalorder %s15, 1
      %s166 = scalar_select %p165, %s15, 1
      %s167 = smul.addr %s166, 4
      %s168 = scalar_lea.vmem %s1, %s167
      %p169 = scmp.lt.s32.totalorder %s15, 1
      %s170 = scalar_select %p169, %s15, 1
      %s171 = smul.addr %s170, 8
      %s172 = scalar_lea.vmem %s2, %s171
      %p173 = scmp.lt.s32.totalorder %s15, 1
      %s174 = scalar_select %p173, %s15, 1
      %s175 = smul.addr %s174, 8
      %s176 = scalar_lea.vmem %s3, %s175
      %v177 = vld [vmem:[%s168] sm:$0xf]
      %v178 = vld [vmem:[%s0] sm:$0xff]
      %s179 = scalar_lea.vmem %s0, 8
      %v180 = vld [vmem:[%s179] sm:$0xff]
      %182 = vrot.lane.b32.xlu0 %v177, 127
      %v183 = vpop.permute.xlu0 %182
      %vm184 = vcmask 31744
      %v186 = vsel %vm184, %v180, 0
      %vm188 = vcmask 1043456
      %v189 = vsel %vm188, %v183, 0
      %191 = vmatprep.subr.mxu0 0.0
      %192 = vmatpush1.msra.mxu0 0.0
      %193 = vmatprep.subr.mxu0 0.0
      %194 = vmatpush1.msra.mxu0 0.0
      %195 = vmatprep.subr.mxu0 0.0
      %196 = vmatpush1.msra.mxu0 0.0
      %197 = vmatprep.subr.mxu0 0.0
      %198 = vmatpush1.msra.mxu0 0.0
      %199 = vmatprep.subr.mxu0 0.0
      %200 = vmatpush1.msra.mxu0 0.0
      %201 = vmatprep.subr.mxu0 0.0
      %202 = vmatpush1.msra.mxu0 0.0
      %203 = vmatprep.subr.mxu0 0.0
      %204 = vmatpush1.msra.mxu0 0.0
      %205 = vmatprep.subr.mxu0 0.0
      %206 = vmatpush1.msra.mxu0 0.0
      %207 = vmatprep.subr.mxu0 0.0
      %208 = vmatpush1.msra.mxu0 0.0
      %209 = vmatprep.subr.mxu0 0.0
      %210 = vmatpush1.msra.mxu0 0.0
      %211 = vmatprep.subr.mxu0 0.0
      %212 = vmatpush1.msra.mxu0 0.0
      %213 = vmatprep.subr.mxu0 0.0
      %214 = vmatpush1.msra.mxu0 0.0
      %215 = vmatprep.subr.mxu0 0.0
      %216 = vmatpush1.msra.mxu0 0.0
      %217 = vmatprep.subr.mxu0 0.0
      %218 = vmatpush1.msra.mxu0 0.0
      %219 = vmatprep.subr.mxu0 0.0
      %220 = vmatpush1.msra.mxu0 0.0
      %221 = vmatprep.subr.mxu0 0.0
      %222 = vmatpush1.msra.mxu0 %v189
      %223 = vmatprep.subr.mxu0 0.0
      %224 = vmatpush2.msra.mxu0 0.0
      %225 = vmatprep.subr.mxu0 0.0
      %226 = vmatpush2.msra.mxu0 0.0
      %227 = vmatprep.subr.mxu0 0.0
      %228 = vmatpush2.msra.mxu0 0.0
      %229 = vmatprep.subr.mxu0 0.0
      %230 = vmatpush2.msra.mxu0 0.0
      %231 = vmatprep.subr.mxu0 0.0
      %232 = vmatpush2.msra.mxu0 0.0
      %233 = vmatprep.subr.mxu0 0.0
      %234 = vmatpush2.msra.mxu0 0.0
      %235 = vmatprep.subr.mxu0 0.0
      %236 = vmatpush2.msra.mxu0 0.0
      %237 = vmatprep.subr.mxu0 0.0
      %238 = vmatpush2.msra.mxu0 0.0
      %239 = vmatprep.subr.mxu0 0.0
      %240 = vmatpush2.msra.mxu0 0.0
      %241 = vmatprep.subr.mxu0 0.0
      %242 = vmatpush2.msra.mxu0 0.0
      %243 = vmatprep.subr.mxu0 0.0
      %244 = vmatpush2.msra.mxu0 0.0
      %245 = vmatprep.subr.mxu0 0.0
      %246 = vmatpush2.msra.mxu0 0.0
      %247 = vmatprep.subr.mxu0 0.0
      %248 = vmatpush2.msra.mxu0 0.0
      %249 = vmatprep.subr.mxu0 0.0
      %250 = vmatpush2.msra.mxu0 0.0
      %251 = vmatprep.subr.mxu0 0.0
      %252 = vmatpush2.msra.mxu0 0.0
      %253 = vmatprep.subr.mxu0 0.0
      %254 = vmatpush2.msra.mxu0 0.0
      %255 = vmatprep.mubr.f32.mxu0 0.0
      %256 = vmatmul.mubr.f32.gmra.mxu0 %v186
      %v257 = vpop.f32.mrf.mxu0
      %v258 = vadd.f32 0.0, %v257
      %v259 = vpop.f32.mrf.mxu0
      %260 = vdwg.mxu0
      %v262 = vsel %vm184, %v178, 0
      %v264 = vsel %vm188, %v177, 0
      %266 = vmatprep.subr.mxu0 0.0
      %267 = vmatpush1.msra.mxu0 0.0
      %268 = vmatprep.subr.mxu0 0.0
      %269 = vmatpush1.msra.mxu0 0.0
      %270 = vmatprep.subr.mxu0 0.0
      %271 = vmatpush1.msra.mxu0 0.0
      %272 = vmatprep.subr.mxu0 0.0
      %273 = vmatpush1.msra.mxu0 0.0
      %274 = vmatprep.subr.mxu0 0.0
      %275 = vmatpush1.msra.mxu0 0.0
      %276 = vmatprep.subr.mxu0 0.0
      %277 = vmatpush1.msra.mxu0 0.0
      %278 = vmatprep.subr.mxu0 0.0
      %279 = vmatpush1.msra.mxu0 0.0
      %280 = vmatprep.subr.mxu0 0.0
      %281 = vmatpush1.msra.mxu0 0.0
      %282 = vmatprep.subr.mxu0 0.0
      %283 = vmatpush1.msra.mxu0 0.0
      %284 = vmatprep.subr.mxu0 0.0
      %285 = vmatpush1.msra.mxu0 0.0
      %286 = vmatprep.subr.mxu0 0.0
      %287 = vmatpush1.msra.mxu0 0.0
      %288 = vmatprep.subr.mxu0 0.0
      %289 = vmatpush1.msra.mxu0 0.0
      %290 = vmatprep.subr.mxu0 0.0
      %291 = vmatpush1.msra.mxu0 0.0
      %292 = vmatprep.subr.mxu0 0.0
      %293 = vmatpush1.msra.mxu0 0.0
      %294 = vmatprep.subr.mxu0 0.0
      %295 = vmatpush1.msra.mxu0 0.0
      %296 = vmatprep.subr.mxu0 0.0
      %297 = vmatpush1.msra.mxu0 %v264
      %298 = vmatprep.subr.mxu0 0.0
      %299 = vmatpush2.msra.mxu0 0.0
      %300 = vmatprep.subr.mxu0 0.0
      %301 = vmatpush2.msra.mxu0 0.0
      %302 = vmatprep.subr.mxu0 0.0
      %303 = vmatpush2.msra.mxu0 0.0
      %304 = vmatprep.subr.mxu0 0.0
      %305 = vmatpush2.msra.mxu0 0.0
      %306 = vmatprep.subr.mxu0 0.0
      %307 = vmatpush2.msra.mxu0 0.0
      %308 = vmatprep.subr.mxu0 0.0
      %309 = vmatpush2.msra.mxu0 0.0
      %310 = vmatprep.subr.mxu0 0.0
      %311 = vmatpush2.msra.mxu0 0.0
      %312 = vmatprep.subr.mxu0 0.0
      %313 = vmatpush2.msra.mxu0 0.0
      %314 = vmatprep.subr.mxu0 0.0
      %315 = vmatpush2.msra.mxu0 0.0
      %316 = vmatprep.subr.mxu0 0.0
      %317 = vmatpush2.msra.mxu0 0.0
      %318 = vmatprep.subr.mxu0 0.0
      %319 = vmatpush2.msra.mxu0 0.0
      %320 = vmatprep.subr.mxu0 0.0
      %321 = vmatpush2.msra.mxu0 0.0
      %322 = vmatprep.subr.mxu0 0.0
      %323 = vmatpush2.msra.mxu0 0.0
      %324 = vmatprep.subr.mxu0 0.0
      %325 = vmatpush2.msra.mxu0 0.0
      %326 = vmatprep.subr.mxu0 0.0
      %327 = vmatpush2.msra.mxu0 0.0
      %328 = vmatprep.subr.mxu0 0.0
      %329 = vmatpush2.msra.mxu0 0.0
      %330 = vmatprep.mubr.f32.mxu0 0.0
      %331 = vmatmul.mubr.f32.gmra.mxu0 %v262
      %v332 = vpop.f32.mrf.mxu0
      %v333 = vadd.f32 %v258, %v332
      %v334 = vpop.f32.mrf.mxu0
      %335 = vdwg.mxu0
      %s336 = scalar_lea.vmem %s0, 16
      %v337 = vld [vmem:[%s336] sm:$0xff]
      %338 = vrot.lane.b32.xlu0 %v177, 126
      %v339 = vpop.permute.xlu0 %338
      %v341 = vsel %vm184, %v337, 0
      %v343 = vsel %vm188, %v339, 0
      %345 = vmatprep.subr.mxu0 0.0
      %346 = vmatpush1.msra.mxu0 0.0
      %347 = vmatprep.subr.mxu0 0.0
      %348 = vmatpush1.msra.mxu0 0.0
      %349 = vmatprep.subr.mxu0 0.0
      %350 = vmatpush1.msra.mxu0 0.0
      %351 = vmatprep.subr.mxu0 0.0
      %352 = vmatpush1.msra.mxu0 0.0
      %353 = vmatprep.subr.mxu0 0.0
      %354 = vmatpush1.msra.mxu0 0.0
      %355 = vmatprep.subr.mxu0 0.0
      %356 = vmatpush1.msra.mxu0 0.0
      %357 = vmatprep.subr.mxu0 0.0
      %358 = vmatpush1.msra.mxu0 0.0
      %359 = vmatprep.subr.mxu0 0.0
      %360 = vmatpush1.msra.mxu0 0.0
      %361 = vmatprep.subr.mxu0 0.0
      %362 = vmatpush1.msra.mxu0 0.0
      %363 = vmatprep.subr.mxu0 0.0
      %364 = vmatpush1.msra.mxu0 0.0
      %365 = vmatprep.subr.mxu0 0.0
      %366 = vmatpush1.msra.mxu0 0.0
      %367 = vmatprep.subr.mxu0 0.0
      %368 = vmatpush1.msra.mxu0 0.0
      %369 = vmatprep.subr.mxu0 0.0
      %370 = vmatpush1.msra.mxu0 0.0
      %371 = vmatprep.subr.mxu0 0.0
      %372 = vmatpush1.msra.mxu0 0.0
      %373 = vmatprep.subr.mxu0 0.0
      %374 = vmatpush1.msra.mxu0 0.0
      %375 = vmatprep.subr.mxu0 0.0
      %376 = vmatpush1.msra.mxu0 %v343
      %377 = vmatprep.subr.mxu0 0.0
      %378 = vmatpush2.msra.mxu0 0.0
      %379 = vmatprep.subr.mxu0 0.0
      %380 = vmatpush2.msra.mxu0 0.0
      %381 = vmatprep.subr.mxu0 0.0
      %382 = vmatpush2.msra.mxu0 0.0
      %383 = vmatprep.subr.mxu0 0.0
      %384 = vmatpush2.msra.mxu0 0.0
      %385 = vmatprep.subr.mxu0 0.0
      %386 = vmatpush2.msra.mxu0 0.0
      %387 = vmatprep.subr.mxu0 0.0
      %388 = vmatpush2.msra.mxu0 0.0
      %389 = vmatprep.subr.mxu0 0.0
      %390 = vmatpush2.msra.mxu0 0.0
      %391 = vmatprep.subr.mxu0 0.0
      %392 = vmatpush2.msra.mxu0 0.0
      %393 = vmatprep.subr.mxu0 0.0
      %394 = vmatpush2.msra.mxu0 0.0
      %395 = vmatprep.subr.mxu0 0.0
      %396 = vmatpush2.msra.mxu0 0.0
      %397 = vmatprep.subr.mxu0 0.0
      %398 = vmatpush2.msra.mxu0 0.0
      %399 = vmatprep.subr.mxu0 0.0
      %400 = vmatpush2.msra.mxu0 0.0
      %401 = vmatprep.subr.mxu0 0.0
      %402 = vmatpush2.msra.mxu0 0.0
      %403 = vmatprep.subr.mxu0 0.0
      %404 = vmatpush2.msra.mxu0 0.0
      %405 = vmatprep.subr.mxu0 0.0
      %406 = vmatpush2.msra.mxu0 0.0
      %407 = vmatprep.subr.mxu0 0.0
      %408 = vmatpush2.msra.mxu0 0.0
      %409 = vmatprep.mubr.f32.mxu0 0.0
      %410 = vmatmul.mubr.f32.gmra.mxu0 %v341
      %v411 = vpop.f32.mrf.mxu0
      %v412 = vadd.f32 0.0, %v411
      %v413 = vpop.f32.mrf.mxu0
      %414 = vdwg.mxu0
      %v415 = vadd.f32 %v333, %v412
      %vm416 = vcmask 130048
      %v417 = vsel %vm416, %v415, 0.0
      %418 = vadd.xlane.f32.xlu0 %v417
      %v419 = vpop.xlane.xlu0 %418
      %vm420 = vcmask 7168
      %421 = vst.msk [vmem:[%s172] sm:$0xff] %vm420, %v419
      %v422 = vmul.f32 %v415, %v415
      %v423 = vsel %vm416, %v422, 0.0
      %424 = vadd.xlane.f32.xlu0 %v423
      %v425 = vpop.xlane.xlu0 %424
      %426 = vst.msk [vmem:[%s176] sm:$0xff] %vm420, %v425
      %p427 = scmp.lt.s32.totalorder %s15, 1
      %s428 = scalar_select %p427, %s15, 1
      %s429 = smul.addr %s428, 8
      %s430 = scalar_lea.vmem %s2, %s429
      %p431 = scmp.lt.s32.totalorder %s15, 1
      %s432 = scalar_select %p431, %s15, 1
      %s433 = smul.addr %s432, 8
      %s434 = scalar_lea.vmem %s3, %s433
      // Predicated region
      $region29: #{tpu_custom_call.1} parent=27 // pred_check
        %p435 = pneg %p80
      $region30: #{tpu_custom_call.1} parent=27 // pred_check_branch
        %437 = sbr.rel (%p435) target = $region32
      $region31: #{tpu_custom_call.1} parent=27 // pred_region
        _
      $region32: #{tpu_custom_call.1} parent=27 // pred_fallthru
        _
      // Predicated region
      $region33: #{tpu_custom_call.1} parent=27 // pred_check
        %p438 = pneg %p106
      $region34: #{tpu_custom_call.1} parent=27 // pred_check_branch
        %440 = sbr.rel (%p438) target = $region36
      $region35: #{tpu_custom_call.1} parent=27 // pred_region
        _
      $region36: #{tpu_custom_call.1} parent=27 // pred_fallthru
        _
    $region28: #{tpu_custom_call.1} parent=5 // pred_fallthru
      _
    %p441 = scmp.le.s32.totalorder 2, %s10
    // Predicated region
    $region37: #{tpu_custom_call.1} parent=5 // pred_check
      %p442 = pneg %p441
    $region38: #{tpu_custom_call.1} parent=5 // pred_check_branch
      %444 = sbr.rel (%p442) target = $region40
    $region39: #{tpu_custom_call.1} parent=5 // pred_region
      %s445 = ssub.s32 %s10, 2
      // Predicated region
      $region41: #{tpu_custom_call.1} parent=39 // pred_check
        %p446 = pneg %p86
      $region42: #{tpu_custom_call.1} parent=39 // pred_check_branch
        %448 = sbr.rel (%p446) target = $region44
      $region43: #{tpu_custom_call.1} parent=39 // pred_region
        %p449 = scmp.lt.s32.totalorder %s16, 1
        %s450 = scalar_select %p449, %s16, 1
        %s451 = smul.addr %s450, 8
        %s452 = scalar_lea.vmem %s2, %s451
      $region44: #{tpu_custom_call.1} parent=39 // pred_fallthru
        _
      // Predicated region
      $region45: #{tpu_custom_call.1} parent=39 // pred_check
        %p453 = pneg %p112
      $region46: #{tpu_custom_call.1} parent=39 // pred_check_branch
        %455 = sbr.rel (%p453) target = $region48
      $region47: #{tpu_custom_call.1} parent=39 // pred_region
        %p456 = scmp.lt.s32.totalorder %s16, 1
        %s457 = scalar_select %p456, %s16, 1
        %s458 = smul.addr %s457, 8
        %s459 = scalar_lea.vmem %s3, %s458
      $region48: #{tpu_custom_call.1} parent=39 // pred_fallthru
        _
    $region40: #{tpu_custom_call.1} parent=5 // pred_fallthru
      _
  $region6: #{tpu_custom_call.1} parent=0 // loop_footer
    %s14 = sadd.s32 1, %s10
  $region7: #{tpu_custom_call.1} parent=0 // loop_footer_branch
    %9 = sbr.rel target = $region3
  $region8: #{tpu_custom_call.1} parent=0 // loop_exit
    _

</llo_original>
